<compile_context>
chip_gen: v7x
topology: tpu7x:2x2x1
jax: 0.10.0
libtpu: 0.0.40
codegen_flags: <defaults>
</compile_context>

<pallas_src>
import jax
import jax.numpy as jnp
from jax.experimental import pallas as pl
from jax.experimental.pallas import tpu as pltpu


def _actor_kernel(s_ref,
                  w1_ref, b1_ref,
                  w2_ref, b2_ref,
                  w3_ref, b3_ref,
                  w4_ref, b4_ref,
                  out_ref):
    # Layer 1: (TB, S) @ (S, 256) -> +bias -> ReLU   (f32 accumulate)
    x = s_ref[...].astype(jnp.bfloat16)
    h = jnp.dot(x, w1_ref[...], preferred_element_type=jnp.float32) + b1_ref[...]
    h = jnp.maximum(h, 0.0)

    # Layer 2: (TB, 256) @ (256, 128) -> +bias -> ReLU
    h = jnp.dot(h.astype(jnp.bfloat16), w2_ref[...],
                preferred_element_type=jnp.float32) + b2_ref[...]
    h = jnp.maximum(h, 0.0)

    # Layer 3: (TB, 128) @ (128, 64) -> +bias -> ReLU
    h = jnp.dot(h.astype(jnp.bfloat16), w3_ref[...],
                preferred_element_type=jnp.float32) + b3_ref[...]
    h = jnp.maximum(h, 0.0)

    # Layer 4: (TB, 64) @ (64, action_dim) -> +bias -> exact sigmoid.
    z = jnp.dot(h.astype(jnp.bfloat16), w4_ref[...],
                preferred_element_type=jnp.float32) + b4_ref[...]
    out_ref[...] = jax.nn.sigmoid(z)


def actor_forward(state, params, *, batch_tile=1024):
    """state: (B, state_dim) f32.  params: bf16 (in,out) weights, f32 (1,out) biases.

    batch_tile: rows per grid step.  1024 is a good default for v6e/v7x and
    stays inside v5e's 16 MiB default scoped-VMEM limit; avoid pushing it past
    ~2048 on v5e without raising vmem_limit_bytes.
    """
    B, state_dim = state.shape
    action_dim = params["w4"].shape[1]

    if B <= batch_tile:
        # One block of exactly B rows (block dim == full array dim: always legal).
        TB = B
    else:
        TB = batch_tile  # multiple of 8; ragged last block handled by Pallas.
    grid = (pl.cdiv(B, TB),)

    const = lambda i: (0, 0)  # weights/biases: same block every grid step
    args = (state,
            params["w1"], params["b1"],
            params["w2"], params["b2"],
            params["w3"], params["b3"],
            params["w4"], params["b4"])

    out = pl.pallas_call(
        _actor_kernel,
        out_shape=jax.ShapeDtypeStruct((B, action_dim), jnp.float32),
        grid=grid,
        in_specs=[
            pl.BlockSpec((TB, state_dim), lambda i: (i, 0)),   # state: tiled over batch
            pl.BlockSpec(params["w1"].shape, const),
            pl.BlockSpec(params["b1"].shape, const),
            pl.BlockSpec(params["w2"].shape, const),
            pl.BlockSpec(params["b2"].shape, const),
            pl.BlockSpec(params["w3"].shape, const),
            pl.BlockSpec(params["b3"].shape, const),
            pl.BlockSpec(params["w4"].shape, const),
            pl.BlockSpec(params["b4"].shape, const),
        ],
        out_specs=pl.BlockSpec((TB, action_dim), lambda i: (i, 0)),
        compiler_params=pltpu.CompilerParams(
            dimension_semantics=("parallel",)),   # v7x: shard batch tiles over 2 TCs
    )(*args)

    return out


def init_actor_params(key, state_dim, action_dim):
    """Deterministic init mirroring the PyTorch module's __init__.

    fanin_init(size) draws uniform(-1/sqrt(size[0]), 1/sqrt(size[0])) where
    size = (out_features, in_features) for nn.Linear weights, so the bound is
    1/sqrt(out_features) for fc1..fc3 (faithful to the reference's quirk).
    fc4 weight uses uniform(-EPS, EPS).  Biases keep the nn.Linear default
    uniform(-1/sqrt(in_features), 1/sqrt(in_features)).
    Weights are stored TRANSPOSED, i.e. shape (in, out), and cast to bf16
    (MXU-native); biases stay f32 as (1, out) rows.
    """
    EPS = 0.003
    dims = [(state_dim, 256), (256, 128), (128, 64), (64, action_dim)]
    keys = jax.random.split(key, 8)
    params = {}
    for i, (fan_in, fan_out) in enumerate(dims):
        kw, kb = keys[2 * i], keys[2 * i + 1]
        if i < 3:
            bound_w = 1.0 / jnp.sqrt(jnp.float32(fan_out))  # fanin_init quirk
        else:
            bound_w = EPS
        bound_b = 1.0 / jnp.sqrt(jnp.float32(fan_in))
        w = jax.random.uniform(kw, (fan_in, fan_out), jnp.float32,
                               minval=-bound_w, maxval=bound_w)
        b = jax.random.uniform(kb, (1, fan_out), jnp.float32,
                               minval=-bound_b, maxval=bound_b)
        params[f"w{i+1}"] = w.astype(jnp.bfloat16)
        params[f"b{i+1}"] = b
    return params


def actor_forward_ref(state, params):
    """Pure-JAX reference with the same bf16-weight / f32-accumulate numerics."""
    def layer(x, w, b):
        return jnp.dot(x.astype(jnp.bfloat16), w,
                       preferred_element_type=jnp.float32) + b
    x = jnp.maximum(layer(state, params["w1"], params["b1"]), 0.0)
    x = jnp.maximum(layer(x, params["w2"], params["b2"]), 0.0)
    x = jnp.maximum(layer(x, params["w3"], params["b3"]), 0.0)
    return jax.nn.sigmoid(layer(x, params["w4"], params["b4"]))


if __name__ == "__main__":
    key = jax.random.PRNGKey(0)
    k_param, k_state, k_state_big = jax.random.split(key, 3)

    state_dim, action_dim = 16, 4
    params = init_actor_params(k_param, state_dim, action_dim)

    # Small RL-rollout batch: single (2, state_dim) block, no padding anywhere.
    state = jax.random.normal(k_state, (2, state_dim), dtype=jnp.float32)
    action = jax.block_until_ready(actor_forward(state, params))
    ref = actor_forward_ref(state, params)
    assert action.shape == (2, action_dim)
    assert jnp.allclose(action, ref, atol=1e-4, rtol=1e-4), "small-batch mismatch"

    # Training-style batch: multi-tile grid with a ragged last block
    # (exercises the cdiv grid path and both-TensorCore sharding on v7x).
    state_big = jax.random.normal(k_state_big, (300, state_dim), dtype=jnp.float32)
    action_big = jax.block_until_ready(
        actor_forward(state_big, params, batch_tile=128))
    ref_big = actor_forward_ref(state_big, params)
    assert action_big.shape == (300, action_dim)
    assert jnp.allclose(action_big, ref_big, atol=1e-4, rtol=1e-4), "big-batch mismatch"

    print("KERNEL_OK")
</pallas_src>

<mosaic_0001>
module attributes {stable_mosaic.version = 11 : i64} {
  func.func @_actor_kernel(%arg0: i32, %arg1: memref<2x16xf32, #tpu.memory_space<vmem>>, %arg2: memref<16x256xbf16, #tpu.memory_space<vmem>>, %arg3: memref<1x256xf32, #tpu.memory_space<vmem>>, %arg4: memref<256x128xbf16, #tpu.memory_space<vmem>>, %arg5: memref<1x128xf32, #tpu.memory_space<vmem>>, %arg6: memref<128x64xbf16, #tpu.memory_space<vmem>>, %arg7: memref<1x64xf32, #tpu.memory_space<vmem>>, %arg8: memref<64x4xbf16, #tpu.memory_space<vmem>>, %arg9: memref<1x4xf32, #tpu.memory_space<vmem>>, %arg10: memref<2x4xf32, #tpu.memory_space<vmem>>) attributes {dimension_semantics = [#tpu.dimension_semantics<parallel>], iteration_bounds = array<i64: 1>, scalar_prefetch = 0 : i64, scratch_operands = 0 : i64, tpu.core_type = #tpu.core_type<tc>, window_params = [{transform_indices = @transform_0, window_bounds = array<i64: 2, 16>}, {pipeline_mode = #tpu.pipeline_mode<synchronous>, transform_indices = @transform_1, window_bounds = array<i64: 16, 256>}, {pipeline_mode = #tpu.pipeline_mode<synchronous>, transform_indices = @transform_2, window_bounds = array<i64: 1, 256>}, {pipeline_mode = #tpu.pipeline_mode<synchronous>, transform_indices = @transform_3, window_bounds = array<i64: 256, 128>}, {pipeline_mode = #tpu.pipeline_mode<synchronous>, transform_indices = @transform_4, window_bounds = array<i64: 1, 128>}, {pipeline_mode = #tpu.pipeline_mode<synchronous>, transform_indices = @transform_5, window_bounds = array<i64: 128, 64>}, {pipeline_mode = #tpu.pipeline_mode<synchronous>, transform_indices = @transform_6, window_bounds = array<i64: 1, 64>}, {pipeline_mode = #tpu.pipeline_mode<synchronous>, transform_indices = @transform_7, window_bounds = array<i64: 64, 4>}, {pipeline_mode = #tpu.pipeline_mode<synchronous>, transform_indices = @transform_8, window_bounds = array<i64: 1, 4>}, {transform_indices = @transform_9, window_bounds = array<i64: 2, 4>}]} {
    %c0 = arith.constant 0 : index
    %c0_0 = arith.constant 0 : index
    %0 = vector.load %arg1[%c0, %c0_0] : memref<2x16xf32, #tpu.memory_space<vmem>>, vector<2x16xf32>
    %1 = arith.truncf %0 : vector<2x16xf32> to vector<2x16xbf16>
    %c0_1 = arith.constant 0 : index
    %c0_2 = arith.constant 0 : index
    %2 = vector.load %arg2[%c0_1, %c0_2] : memref<16x256xbf16, #tpu.memory_space<vmem>>, vector<16x256xbf16>
    %cst = arith.constant dense<0.000000e+00> : vector<2x256xf32>
    %3 = tpu.matmul %1, %2, %cst {dimension_numbers = #tpu.dot_dimension_numbers<[1], [0], [0], [1], [0, 0, 1, 1], [], []>} : vector<2x16xbf16>, vector<16x256xbf16>, vector<2x256xf32> -> vector<2x256xf32>
    %c0_3 = arith.constant 0 : index
    %c0_4 = arith.constant 0 : index
    %4 = vector.load %arg3[%c0_3, %c0_4] : memref<1x256xf32, #tpu.memory_space<vmem>>, vector<1x256xf32>
    %5 = vector.broadcast %4 : vector<1x256xf32> to vector<2x256xf32>
    %6 = arith.addf %3, %5 : vector<2x256xf32>
    %cst_5 = arith.constant 0.000000e+00 : f32
    %7 = vector.broadcast %cst_5 : f32 to vector<2x256xf32>
    %8 = arith.maximumf %6, %7 : vector<2x256xf32>
    %9 = arith.truncf %8 : vector<2x256xf32> to vector<2x256xbf16>
    %c0_6 = arith.constant 0 : index
    %c0_7 = arith.constant 0 : index
    %10 = vector.load %arg4[%c0_6, %c0_7] : memref<256x128xbf16, #tpu.memory_space<vmem>>, vector<256x128xbf16>
    %cst_8 = arith.constant dense<0.000000e+00> : vector<2x128xf32>
    %11 = tpu.matmul %9, %10, %cst_8 {dimension_numbers = #tpu.dot_dimension_numbers<[1], [0], [0], [1], [0, 0, 1, 1], [], []>} : vector<2x256xbf16>, vector<256x128xbf16>, vector<2x128xf32> -> vector<2x128xf32>
    %c0_9 = arith.constant 0 : index
    %c0_10 = arith.constant 0 : index
    %12 = vector.load %arg5[%c0_9, %c0_10] : memref<1x128xf32, #tpu.memory_space<vmem>>, vector<1x128xf32>
    %13 = vector.broadcast %12 : vector<1x128xf32> to vector<2x128xf32>
    %14 = arith.addf %11, %13 : vector<2x128xf32>
    %cst_11 = arith.constant 0.000000e+00 : f32
    %15 = vector.broadcast %cst_11 : f32 to vector<2x128xf32>
    %16 = arith.maximumf %14, %15 : vector<2x128xf32>
    %17 = arith.truncf %16 : vector<2x128xf32> to vector<2x128xbf16>
    %c0_12 = arith.constant 0 : index
    %c0_13 = arith.constant 0 : index
    %18 = vector.load %arg6[%c0_12, %c0_13] : memref<128x64xbf16, #tpu.memory_space<vmem>>, vector<128x64xbf16>
    %cst_14 = arith.constant dense<0.000000e+00> : vector<2x64xf32>
    %19 = tpu.matmul %17, %18, %cst_14 {dimension_numbers = #tpu.dot_dimension_numbers<[1], [0], [0], [1], [0, 0, 1, 1], [], []>} : vector<2x128xbf16>, vector<128x64xbf16>, vector<2x64xf32> -> vector<2x64xf32>
    %c0_15 = arith.constant 0 : index
    %c0_16 = arith.constant 0 : index
    %20 = vector.load %arg7[%c0_15, %c0_16] : memref<1x64xf32, #tpu.memory_space<vmem>>, vector<1x64xf32>
    %21 = vector.broadcast %20 : vector<1x64xf32> to vector<2x64xf32>
    %22 = arith.addf %19, %21 : vector<2x64xf32>
    %cst_17 = arith.constant 0.000000e+00 : f32
    %23 = vector.broadcast %cst_17 : f32 to vector<2x64xf32>
    %24 = arith.maximumf %22, %23 : vector<2x64xf32>
    %25 = arith.truncf %24 : vector<2x64xf32> to vector<2x64xbf16>
    %c0_18 = arith.constant 0 : index
    %c0_19 = arith.constant 0 : index
    %26 = vector.load %arg8[%c0_18, %c0_19] : memref<64x4xbf16, #tpu.memory_space<vmem>>, vector<64x4xbf16>
    %cst_20 = arith.constant dense<0.000000e+00> : vector<2x4xf32>
    %27 = tpu.matmul %25, %26, %cst_20 {dimension_numbers = #tpu.dot_dimension_numbers<[1], [0], [0], [1], [0, 0, 1, 1], [], []>} : vector<2x64xbf16>, vector<64x4xbf16>, vector<2x4xf32> -> vector<2x4xf32>
    %c0_21 = arith.constant 0 : index
    %c0_22 = arith.constant 0 : index
    %28 = vector.load %arg9[%c0_21, %c0_22] : memref<1x4xf32, #tpu.memory_space<vmem>>, vector<1x4xf32>
    %29 = vector.broadcast %28 : vector<1x4xf32> to vector<2x4xf32>
    %30 = arith.addf %27, %29 : vector<2x4xf32>
    %31 = arith.negf %30 : vector<2x4xf32>
    %32 = math.exp %31 : vector<2x4xf32>
    %cst_23 = arith.constant 1.000000e+00 : f32
    %33 = vector.broadcast %cst_23 : f32 to vector<2x4xf32>
    %34 = arith.addf %33, %32 : vector<2x4xf32>
    %35 = arith.divf %33, %34 : vector<2x4xf32>
    %c0_24 = arith.constant 0 : index
    %c0_25 = arith.constant 0 : index
    %36 = vector.load %arg10[%c0_24, %c0_25] : memref<2x4xf32, #tpu.memory_space<vmem>>, vector<2x4xf32>
    tpu.vector_store %arg10[%c0_24, %c0_25], %35 {strides = array<i32>} : memref<2x4xf32, #tpu.memory_space<vmem>>, vector<2x4xf32>,
    return
  }
  func.func @transform_0(%arg0: i32) -> (i32, i32) {
    %c0_i32 = arith.constant 0 : i32
    %c0_i32_0 = arith.constant 0 : i32
    return %arg0, %c0_i32 : i32, i32
  }
  func.func @transform_1(%arg0: i32) -> (i32, i32) {
    %c0_i32 = arith.constant 0 : i32
    %c0_i32_0 = arith.constant 0 : i32
    %c0_i32_1 = arith.constant 0 : i32
    return %c0_i32, %c0_i32_0 : i32, i32
  }
  func.func @transform_2(%arg0: i32) -> (i32, i32) {
    %c0_i32 = arith.constant 0 : i32
    %c0_i32_0 = arith.constant 0 : i32
    %c0_i32_1 = arith.constant 0 : i32
    return %c0_i32, %c0_i32_0 : i32, i32
  }
  func.func @transform_3(%arg0: i32) -> (i32, i32) {
    %c0_i32 = arith.constant 0 : i32
    %c0_i32_0 = arith.constant 0 : i32
    %c0_i32_1 = arith.constant 0 : i32
    return %c0_i32, %c0_i32_0 : i32, i32
  }
  func.func @transform_4(%arg0: i32) -> (i32, i32) {
    %c0_i32 = arith.constant 0 : i32
    %c0_i32_0 = arith.constant 0 : i32
    %c0_i32_1 = arith.constant 0 : i32
    return %c0_i32, %c0_i32_0 : i32, i32
  }
  func.func @transform_5(%arg0: i32) -> (i32, i32) {
    %c0_i32 = arith.constant 0 : i32
    %c0_i32_0 = arith.constant 0 : i32
    %c0_i32_1 = arith.constant 0 : i32
    return %c0_i32, %c0_i32_0 : i32, i32
  }
  func.func @transform_6(%arg0: i32) -> (i32, i32) {
    %c0_i32 = arith.constant 0 : i32
    %c0_i32_0 = arith.constant 0 : i32
    %c0_i32_1 = arith.constant 0 : i32
    return %c0_i32, %c0_i32_0 : i32, i32
  }
  func.func @transform_7(%arg0: i32) -> (i32, i32) {
    %c0_i32 = arith.constant 0 : i32
    %c0_i32_0 = arith.constant 0 : i32
    %c0_i32_1 = arith.constant 0 : i32
    return %c0_i32, %c0_i32_0 : i32, i32
  }
  func.func @transform_8(%arg0: i32) -> (i32, i32) {
    %c0_i32 = arith.constant 0 : i32
    %c0_i32_0 = arith.constant 0 : i32
    %c0_i32_1 = arith.constant 0 : i32
    return %c0_i32, %c0_i32_0 : i32, i32
  }
  func.func @transform_9(%arg0: i32) -> (i32, i32) {
    %c0_i32 = arith.constant 0 : i32
    %c0_i32_0 = arith.constant 0 : i32
    return %arg0, %c0_i32 : i32, i32
  }
}

</mosaic_0001>

<llo_original>
// kernel: tpu_custom_call.1
$region0: #{tpu_custom_call.1}
  #allocation0 [shape = 'u32[]', space=smem, size = 0x4, offset = 0x4, fixed_abs, tag = 'smem constant byte address 0x4 - core index']
  #allocation1 [shape = 'u32[144,128]{1,0:T(1,128)}', space=vmem, size = 0x12000, scoped, tag = 'internal scratch']
  %s0 = inlined_call_operand.vmem [shape: f32[2,16], index: 0, kind: input, shape index: {}]
  %s1 = inlined_call_operand.hbm [shape: bf16[16,256], index: 1, kind: input, shape index: {}]
  %s2 = inlined_call_operand.vmem [shape: f32[1,256], index: 2, kind: input, shape index: {}]
  %s3 = inlined_call_operand.vmem [shape: bf16[256,128], index: 3, kind: input, shape index: {}]
  %s4 = inlined_call_operand.vmem [shape: f32[1,128], index: 4, kind: input, shape index: {}]
  %s5 = inlined_call_operand.vmem [shape: bf16[128,64], index: 5, kind: input, shape index: {}]
  %s6 = inlined_call_operand.vmem [shape: f32[1,64], index: 6, kind: input, shape index: {}]
  %s7 = inlined_call_operand.vmem [shape: bf16[64,4], index: 7, kind: input, shape index: {}]
  %s8 = inlined_call_operand.vmem [shape: f32[1,4], index: 8, kind: input, shape index: {}]
  %s9 = inlined_call_operand.hbm [shape: f32[2,4], index: 9, kind: output, shape index: {}]
  %s10 = sld [smem:[#allocation0]]
  $region50: #{tpu_custom_call.1} parent=0
    _
  %s12 = ssub.s32 1, %s10
  %s13 = scalar_select 0, %s12, %s10
  $region1: #{tpu_custom_call.1} parent=0
    #allocation2 [shape = 'u8[8192]{0}', space=vmem, size = 0x2000, scoped, tag = 'input window, operand 1, single buffered']
    #allocation3 [shape = 's32[1]{0}', space=sflag, size = 0x4, scoped, tag = 'scoped memory for tpu_custom_call.1']
    #allocation4 [shape = 's32[1]{0}', space=sflag, size = 0x4, scoped, tag = 'scoped memory for tpu_custom_call.1']
    #allocation5 [shape = 'u8[1024]{0}', space=vmem, size = 0x400, scoped, tag = 'output window, operand 0, single buffered']
    %14 = vsyncpa [#allocation3], 0
    %15 = vsyncpa [#allocation4], 0
    // Predicated region
    $region2: #{tpu_custom_call.1} parent=1 // pred_check
      _
    $region3: #{tpu_custom_call.1} parent=1 // pred_check_branch
      %17 = sbr.rel (0) target = $region5
    $region4: #{tpu_custom_call.1} parent=1 // pred_region
      _
    $region5: #{tpu_custom_call.1} parent=1 // pred_fallthru
      _
    // Predicated region
    $region6: #{tpu_custom_call.1} parent=1 // pred_check
      _
    $region7: #{tpu_custom_call.1} parent=1 // pred_check_branch
      %19 = sbr.rel (0) target = $region9
    $region8: #{tpu_custom_call.1} parent=1 // pred_region
      %s21 = ssub.s32 256, 256
      %22 = vsyncadd [#allocation3], %s21
      %s23 = sshll.u32 [#allocation2], 4
      %s24 = int_to_ptr.vmem [resolvable:$true] %s23
      %29 = dma.hbm_to_vmem [thread:$0]  %s1, 256, %s24, [#allocation3], 128, 128, 8
    $region9: #{tpu_custom_call.1} parent=1 // pred_fallthru
      _
    // Predicated region
    $region10: #{tpu_custom_call.1} parent=1 // pred_check
      _
    $region11: #{tpu_custom_call.1} parent=1 // pred_check_branch
      %31 = sbr.rel (0) target = $region13
    $region12: #{tpu_custom_call.1} parent=1 // pred_region
      _
    $region13: #{tpu_custom_call.1} parent=1 // pred_fallthru
      _
    // Predicated region
    $region14: #{tpu_custom_call.1} parent=1 // pred_check
      _
    $region15: #{tpu_custom_call.1} parent=1 // pred_check_branch
      %33 = sbr.rel (0) target = $region17
    $region16: #{tpu_custom_call.1} parent=1 // pred_region
      _
    $region17: #{tpu_custom_call.1} parent=1 // pred_fallthru
      _
    // Predicated region
    $region18: #{tpu_custom_call.1} parent=1 // pred_check
      _
    $region19: #{tpu_custom_call.1} parent=1 // pred_check_branch
      %35 = sbr.rel (0) target = $region21
    $region20: #{tpu_custom_call.1} parent=1 // pred_region
      _
    $region21: #{tpu_custom_call.1} parent=1 // pred_fallthru
      _
    // Predicated region
    $region22: #{tpu_custom_call.1} parent=1 // pred_check
      _
    $region23: #{tpu_custom_call.1} parent=1 // pred_check_branch
      %37 = sbr.rel (0) target = $region25
    $region24: #{tpu_custom_call.1} parent=1 // pred_region
      _
    $region25: #{tpu_custom_call.1} parent=1 // pred_fallthru
      _
    // Predicated region
    $region26: #{tpu_custom_call.1} parent=1 // pred_check
      _
    $region27: #{tpu_custom_call.1} parent=1 // pred_check_branch
      %39 = sbr.rel (0) target = $region29
    $region28: #{tpu_custom_call.1} parent=1 // pred_region
      _
    $region29: #{tpu_custom_call.1} parent=1 // pred_fallthru
      _
    // Predicated region
    $region30: #{tpu_custom_call.1} parent=1 // pred_check
      _
    $region31: #{tpu_custom_call.1} parent=1 // pred_check_branch
      %41 = sbr.rel (0) target = $region33
    $region32: #{tpu_custom_call.1} parent=1 // pred_region
      _
    $region33: #{tpu_custom_call.1} parent=1 // pred_fallthru
      _
    // Predicated region
    $region34: #{tpu_custom_call.1} parent=1 // pred_check
      _
    $region35: #{tpu_custom_call.1} parent=1 // pred_check_branch
      %43 = sbr.rel (0) target = $region37
    $region36: #{tpu_custom_call.1} parent=1 // pred_region
      _
    $region37: #{tpu_custom_call.1} parent=1 // pred_fallthru
      _
    // Predicated region
    $region38: #{tpu_custom_call.1} parent=1 // pred_check
      _
    $region39: #{tpu_custom_call.1} parent=1 // pred_check_branch
      %45 = sbr.rel (0) target = $region41
    $region40: #{tpu_custom_call.1} parent=1 // pred_region
      %46 = dma.done [#allocation3], 256
    $region41: #{tpu_custom_call.1} parent=1 // pred_fallthru
      _
    %v48 = vld [vmem:[%s0] sm:$0x3]
    %v49 = vpack.c.bf16 %v48, %v48
    %v50 = vld [vmem:[#allocation2] sm:$0xff]
    %v51 = vld [vmem:[#allocation2 + $0x8] sm:$0xff]
    %v52 = vld [vmem:[%s2] sm:$0x3]
    %v54 = vlaneseq
    %v55 = vshrl.u32 %v54, 7
    %v56 = vsub.s32 0, %v55
    %v57 = vrot.slane %v52, %v56
    %v58 = vlaneseq
    %v59 = vshrl.u32 %v58, 7
    %v60 = vsub.s32 1, %v59
    %v61 = vrot.slane %v52, %v60
    %v66 = vunpack.c.l.b16 %v50
    %v67 = vunpack.c.h.b16 %v50
    %v68 = vunpack.c.l.b16 %v51
    %v69 = vunpack.c.h.b16 %v51
    %v70 = vpack.c.b16 %v68, %v66
    %v71 = vpack.c.b16 %v69, %v67
    %vm74 = vcmask 130048
    %v76 = vsel %vm74, %v49, 0
    %78 = vmatprep.subr.bf16.mxu0 %v71
    %79 = vmatpush1.bf16.msra.mxu0 %v70
    %80 = vmatprep.subr.bf16.mxu0 0
    %81 = vmatpush1.bf16.msra.mxu0 0
    %82 = vmatprep.subr.bf16.mxu0 0
    %83 = vmatpush1.bf16.msra.mxu0 0
    %84 = vmatprep.subr.bf16.mxu0 0
    %85 = vmatpush1.bf16.msra.mxu0 0
    %86 = vmatprep.subr.bf16.mxu0 0
    %87 = vmatpush1.bf16.msra.mxu0 0
    %88 = vmatprep.subr.bf16.mxu0 0
    %89 = vmatpush1.bf16.msra.mxu0 0
    %90 = vmatprep.subr.bf16.mxu0 0
    %91 = vmatpush1.bf16.msra.mxu0 0
    %92 = vmatprep.subr.bf16.mxu0 0
    %93 = vmatpush1.bf16.msra.mxu0 0
    %94 = vmatprep.subr.bf16.mxu0 0
    %95 = vmatpush1.bf16.msra.mxu0 0
    %96 = vmatprep.subr.bf16.mxu0 0
    %97 = vmatpush1.bf16.msra.mxu0 0
    %98 = vmatprep.subr.bf16.mxu0 0
    %99 = vmatpush1.bf16.msra.mxu0 0
    %100 = vmatprep.subr.bf16.mxu0 0
    %101 = vmatpush1.bf16.msra.mxu0 0
    %102 = vmatprep.subr.bf16.mxu0 0
    %103 = vmatpush1.bf16.msra.mxu0 0
    %104 = vmatprep.subr.bf16.mxu0 0
    %105 = vmatpush1.bf16.msra.mxu0 0
    %106 = vmatprep.subr.bf16.mxu0 0
    %107 = vmatpush1.bf16.msra.mxu0 0
    %108 = vmatprep.subr.bf16.mxu0 0
    %109 = vmatpush1.bf16.msra.mxu0 0
    %110 = vmatprep.mubr.bf16.mxu0 0
    %111 = vmatmul.mubr.bf16.gmra.mrb[0].mxu0 %v76
    %v112 = vpop.f32.mrb[0].mxu0
    %v113 = vadd.f32 %v57, %v112
    %v114 = vpop.f32.mrb[0].mxu0
    %v115 = vadd.f32 %v61, %v114
    %v116 = vpop.f32.mrb[0].mxu0
    %v117 = vpop.f32.mrb[0].mxu0
    %118 = vdwg.mxu0
    %v119 = vmax.f32 %v113, 0.0
    %v120 = vmax.f32 %v115, 0.0
    %v121 = vpack.c.bf16 %v119, %v119
    %v122 = vpack.c.bf16 %v120, %v120
    %v123 = vld [vmem:[%s3] sm:$0xf]
    %v124 = vld [vmem:[%s3 + $0x4] sm:$0xf]
    %v125 = vld [vmem:[%s3 + $0x8] sm:$0xf]
    %v126 = vld [vmem:[%s3 + $0xc] sm:$0xf]
    %v127 = vld [vmem:[%s3 + $0x10] sm:$0xf]
    %v128 = vld [vmem:[%s3 + $0x14] sm:$0xf]
    %v129 = vld [vmem:[%s3 + $0x18] sm:$0xf]
    %v130 = vld [vmem:[%s3 + $0x1c] sm:$0xf]
    %v131 = vld [vmem:[%s3 + $0x20] sm:$0xf]
    %v132 = vld [vmem:[%s3 + $0x24] sm:$0xf]
    %v133 = vld [vmem:[%s3 + $0x28] sm:$0xf]
    %v134 = vld [vmem:[%s3 + $0x2c] sm:$0xf]
    %v135 = vld [vmem:[%s3 + $0x30] sm:$0xf]
    %v136 = vld [vmem:[%s3 + $0x34] sm:$0xf]
    %v137 = vld [vmem:[%s3 + $0x38] sm:$0xf]
    %v138 = vld [vmem:[%s3 + $0x3c] sm:$0xf]
    %v139 = vld [vmem:[%s3 + $0x40] sm:$0xf]
    %v140 = vld [vmem:[%s3 + $0x44] sm:$0xf]
    %v141 = vld [vmem:[%s3 + $0x48] sm:$0xf]
    %v142 = vld [vmem:[%s3 + $0x4c] sm:$0xf]
    %v143 = vld [vmem:[%s3 + $0x50] sm:$0xf]
    %v144 = vld [vmem:[%s3 + $0x54] sm:$0xf]
    %v145 = vld [vmem:[%s3 + $0x58] sm:$0xf]
    %v146 = vld [vmem:[%s3 + $0x5c] sm:$0xf]
    %v147 = vld [vmem:[%s3 + $0x60] sm:$0xf]
    %v148 = vld [vmem:[%s3 + $0x64] sm:$0xf]
    %v149 = vld [vmem:[%s3 + $0x68] sm:$0xf]
    %v150 = vld [vmem:[%s3 + $0x6c] sm:$0xf]
    %v151 = vld [vmem:[%s3 + $0x70] sm:$0xf]
    %v152 = vld [vmem:[%s3 + $0x74] sm:$0xf]
    %v153 = vld [vmem:[%s3 + $0x78] sm:$0xf]
    %v154 = vld [vmem:[%s3 + $0x7c] sm:$0xf]
    %v155 = vld [vmem:[%s4] sm:$0x1]
    %v157 = vlaneseq
    %v158 = vshrl.u32 %v157, 7
    %v159 = vsub.s32 0, %v158
    %v160 = vrot.slane %v155, %v159
    %v194 = vunpack.c.l.b16 %v123
    %v195 = vunpack.c.l.b16 %v124
    %v196 = vunpack.c.l.b16 %v125
    %v197 = vunpack.c.l.b16 %v126
    %v198 = vunpack.c.l.b16 %v127
    %v199 = vunpack.c.l.b16 %v128
    %v200 = vunpack.c.l.b16 %v129
    %v201 = vunpack.c.l.b16 %v130
    %v202 = vunpack.c.l.b16 %v131
    %v203 = vunpack.c.l.b16 %v132
    %v204 = vunpack.c.l.b16 %v133
    %v205 = vunpack.c.l.b16 %v134
    %v206 = vunpack.c.l.b16 %v135
    %v207 = vunpack.c.l.b16 %v136
    %v208 = vunpack.c.l.b16 %v137
    %v209 = vunpack.c.l.b16 %v138
    %v210 = vunpack.c.l.b16 %v139
    %v211 = vunpack.c.l.b16 %v140
    %v212 = vunpack.c.l.b16 %v141
    %v213 = vunpack.c.l.b16 %v142
    %v214 = vunpack.c.l.b16 %v143
    %v215 = vunpack.c.l.b16 %v144
    %v216 = vunpack.c.l.b16 %v145
    %v217 = vunpack.c.l.b16 %v146
    %v218 = vunpack.c.l.b16 %v147
    %v219 = vunpack.c.l.b16 %v148
    %v220 = vunpack.c.l.b16 %v149
    %v221 = vunpack.c.l.b16 %v150
    %v222 = vunpack.c.l.b16 %v151
    %v223 = vunpack.c.l.b16 %v152
    %v224 = vunpack.c.l.b16 %v153
    %v225 = vunpack.c.l.b16 %v154
    %v226 = vpack.c.b16 %v195, %v194
    %v227 = vpack.c.b16 %v197, %v196
    %v228 = vpack.c.b16 %v199, %v198
    %v229 = vpack.c.b16 %v201, %v200
    %v230 = vpack.c.b16 %v203, %v202
    %v231 = vpack.c.b16 %v205, %v204
    %v232 = vpack.c.b16 %v207, %v206
    %v233 = vpack.c.b16 %v209, %v208
    %v234 = vpack.c.b16 %v211, %v210
    %v235 = vpack.c.b16 %v213, %v212
    %v236 = vpack.c.b16 %v215, %v214
    %v237 = vpack.c.b16 %v217, %v216
    %v238 = vpack.c.b16 %v219, %v218
    %v239 = vpack.c.b16 %v221, %v220
    %v240 = vpack.c.b16 %v223, %v222
    %v241 = vpack.c.b16 %v225, %v224
    %258 = vmatprep.subr.bf16.mxu0 0
    %259 = vmatpush1.bf16.msra.mxu0 %v226
    %260 = vmatprep.subr.bf16.mxu0 0
    %261 = vmatpush1.bf16.msra.mxu0 %v227
    %262 = vmatprep.subr.bf16.mxu0 0
    %263 = vmatpush1.bf16.msra.mxu0 %v228
    %264 = vmatprep.subr.bf16.mxu0 0
    %265 = vmatpush1.bf16.msra.mxu0 %v229
    %266 = vmatprep.subr.bf16.mxu0 0
    %267 = vmatpush1.bf16.msra.mxu0 %v230
    %268 = vmatprep.subr.bf16.mxu0 0
    %269 = vmatpush1.bf16.msra.mxu0 %v231
    %270 = vmatprep.subr.bf16.mxu0 0
    %271 = vmatpush1.bf16.msra.mxu0 %v232
    %272 = vmatprep.subr.bf16.mxu0 0
    %273 = vmatpush1.bf16.msra.mxu0 %v233
    %274 = vmatprep.subr.bf16.mxu0 0
    %275 = vmatpush1.bf16.msra.mxu0 %v234
    %276 = vmatprep.subr.bf16.mxu0 0
    %277 = vmatpush1.bf16.msra.mxu0 %v235
    %278 = vmatprep.subr.bf16.mxu0 0
    %279 = vmatpush1.bf16.msra.mxu0 %v236
    %280 = vmatprep.subr.bf16.mxu0 0
    %281 = vmatpush1.bf16.msra.mxu0 %v237
    %282 = vmatprep.subr.bf16.mxu0 0
    %283 = vmatpush1.bf16.msra.mxu0 %v238
    %284 = vmatprep.subr.bf16.mxu0 0
    %285 = vmatpush1.bf16.msra.mxu0 %v239
    %286 = vmatprep.subr.bf16.mxu0 0
    %287 = vmatpush1.bf16.msra.mxu0 %v240
    %288 = vmatprep.subr.bf16.mxu0 0
    %289 = vmatpush1.bf16.msra.mxu0 %v241
    %290 = vmatprep.mubr.bf16.mxu0 %v122
    %291 = vmatmul.mubr.bf16.gmra.mrb[0].mxu0 %v121
    %v292 = vpop.f32.mrb[0].mxu0
    %v293 = vadd.f32 %v160, %v292
    %v294 = vpop.f32.mrb[0].mxu0
    %v295 = vpop.f32.mrb[0].mxu0
    %v296 = vpop.f32.mrb[0].mxu0
    %297 = vdwg.mxu0
    %v298 = vmax.f32 %v293, 0.0
    %v299 = vpack.c.bf16 %v298, %v298
    %v300 = vld [vmem:[%s5] sm:$0xf]
    %v301 = vld [vmem:[%s5 + $0x4] sm:$0xf]
    %v302 = vld [vmem:[%s5 + $0x8] sm:$0xf]
    %v303 = vld [vmem:[%s5 + $0xc] sm:$0xf]
    %v304 = vld [vmem:[%s5 + $0x10] sm:$0xf]
    %v305 = vld [vmem:[%s5 + $0x14] sm:$0xf]
    %v306 = vld [vmem:[%s5 + $0x18] sm:$0xf]
    %v307 = vld [vmem:[%s5 + $0x1c] sm:$0xf]
    %v308 = vld [vmem:[%s5 + $0x20] sm:$0xf]
    %v309 = vld [vmem:[%s5 + $0x24] sm:$0xf]
    %v310 = vld [vmem:[%s5 + $0x28] sm:$0xf]
    %v311 = vld [vmem:[%s5 + $0x2c] sm:$0xf]
    %v312 = vld [vmem:[%s5 + $0x30] sm:$0xf]
    %v313 = vld [vmem:[%s5 + $0x34] sm:$0xf]
    %v314 = vld [vmem:[%s5 + $0x38] sm:$0xf]
    %v315 = vld [vmem:[%s5 + $0x3c] sm:$0xf]
    %v316 = vld [vmem:[%s6] sm:$0x1]
    %v318 = vlaneseq
    %v319 = vshrl.u32 %v318, 7
    %v320 = vsub.s32 0, %v319
    %v321 = vrot.slane %v316, %v320
    %v339 = vunpack.c.l.b16 %v300
    %v340 = vunpack.c.l.b16 %v301
    %v341 = vunpack.c.l.b16 %v302
    %v342 = vunpack.c.l.b16 %v303
    %v343 = vunpack.c.l.b16 %v304
    %v344 = vunpack.c.l.b16 %v305
    %v345 = vunpack.c.l.b16 %v306
    %v346 = vunpack.c.l.b16 %v307
    %v347 = vunpack.c.l.b16 %v308
    %v348 = vunpack.c.l.b16 %v309
    %v349 = vunpack.c.l.b16 %v310
    %v350 = vunpack.c.l.b16 %v311
    %v351 = vunpack.c.l.b16 %v312
    %v352 = vunpack.c.l.b16 %v313
    %v353 = vunpack.c.l.b16 %v314
    %v354 = vunpack.c.l.b16 %v315
    %v355 = vpack.c.b16 %v340, %v339
    %v356 = vpack.c.b16 %v342, %v341
    %v357 = vpack.c.b16 %v344, %v343
    %v358 = vpack.c.b16 %v346, %v345
    %v359 = vpack.c.b16 %v348, %v347
    %v360 = vpack.c.b16 %v350, %v349
    %v361 = vpack.c.b16 %v352, %v351
    %v362 = vpack.c.b16 %v354, %v353
    %371 = vmatprep.subr.bf16.mxu0 0
    %372 = vmatpush1.bf16.msra.mxu0 %v355
    %373 = vmatprep.subr.bf16.mxu0 0
    %374 = vmatpush1.bf16.msra.mxu0 %v356
    %375 = vmatprep.subr.bf16.mxu0 0
    %376 = vmatpush1.bf16.msra.mxu0 %v357
    %377 = vmatprep.subr.bf16.mxu0 0
    %378 = vmatpush1.bf16.msra.mxu0 %v358
    %379 = vmatprep.subr.bf16.mxu0 0
    %380 = vmatpush1.bf16.msra.mxu0 %v359
    %381 = vmatprep.subr.bf16.mxu0 0
    %382 = vmatpush1.bf16.msra.mxu0 %v360
    %383 = vmatprep.subr.bf16.mxu0 0
    %384 = vmatpush1.bf16.msra.mxu0 %v361
    %385 = vmatprep.subr.bf16.mxu0 0
    %386 = vmatpush1.bf16.msra.mxu0 %v362
    %387 = vmatprep.subr.bf16.mxu0 0
    %388 = vmatpush1.bf16.msra.mxu0 0
    %389 = vmatprep.subr.bf16.mxu0 0
    %390 = vmatpush1.bf16.msra.mxu0 0
    %391 = vmatprep.subr.bf16.mxu0 0
    %392 = vmatpush1.bf16.msra.mxu0 0
    %393 = vmatprep.subr.bf16.mxu0 0
    %394 = vmatpush1.bf16.msra.mxu0 0
    %395 = vmatprep.subr.bf16.mxu0 0
    %396 = vmatpush1.bf16.msra.mxu0 0
    %397 = vmatprep.subr.bf16.mxu0 0
    %398 = vmatpush1.bf16.msra.mxu0 0
    %399 = vmatprep.subr.bf16.mxu0 0
    %400 = vmatpush1.bf16.msra.mxu0 0
    %401 = vmatprep.subr.bf16.mxu0 0
    %402 = vmatpush1.bf16.msra.mxu0 0
    %403 = vmatprep.mubr.bf16.mxu0 0
    %404 = vmatmul.mubr.bf16.gmra.mrb[0].mxu0 %v299
    %v405 = vpop.f32.mrb[0].mxu0
    %v406 = vadd.f32 %v321, %v405
    %v407 = vpop.f32.mrb[0].mxu0
    %v408 = vpop.f32.mrb[0].mxu0
    %v409 = vpop.f32.mrb[0].mxu0
    %410 = vdwg.mxu0
    %v411 = vmax.f32 %v406, 0.0
    %v412 = vpack.c.bf16 %v411, %v411
    %v413 = vld [vmem:[%s7] sm:$0xf]
    %v414 = vld [vmem:[%s7 + $0x4] sm:$0xf]
    %v415 = vld [vmem:[%s7 + $0x8] sm:$0xf]
    %v416 = vld [vmem:[%s7 + $0xc] sm:$0xf]
    %v417 = vld [vmem:[%s7 + $0x10] sm:$0xf]
    %v418 = vld [vmem:[%s7 + $0x14] sm:$0xf]
    %v419 = vld [vmem:[%s7 + $0x18] sm:$0xf]
    %v420 = vld [vmem:[%s7 + $0x1c] sm:$0xf]
    %v421 = vld [vmem:[%s8] sm:$0x1]
    %v423 = vlaneseq
    %v424 = vshrl.u32 %v423, 7
    %v425 = vsub.s32 0, %v424
    %v426 = vrot.slane %v421, %v425
    %v436 = vunpack.c.l.b16 %v413
    %v437 = vunpack.c.l.b16 %v414
    %v438 = vunpack.c.l.b16 %v415
    %v439 = vunpack.c.l.b16 %v416
    %v440 = vunpack.c.l.b16 %v417
    %v441 = vunpack.c.l.b16 %v418
    %v442 = vunpack.c.l.b16 %v419
    %v443 = vunpack.c.l.b16 %v420
    %v444 = vpack.c.b16 %v437, %v436
    %v445 = vpack.c.b16 %v439, %v438
    %v446 = vpack.c.b16 %v441, %v440
    %v447 = vpack.c.b16 %v443, %v442
    %vm452 = vcmask 523264
    %v454 = vsel %vm452, %v412, 0
    %456 = vmatprep.subr.bf16.mxu0 0
    %457 = vmatpush1.bf16.msra.mxu0 %v444
    %458 = vmatprep.subr.bf16.mxu0 0
    %459 = vmatpush1.bf16.msra.mxu0 %v445
    %460 = vmatprep.subr.bf16.mxu0 0
    %461 = vmatpush1.bf16.msra.mxu0 %v446
    %462 = vmatprep.subr.bf16.mxu0 0
    %463 = vmatpush1.bf16.msra.mxu0 %v447
    %464 = vmatprep.subr.bf16.mxu0 0
    %465 = vmatpush1.bf16.msra.mxu0 0
    %466 = vmatprep.subr.bf16.mxu0 0
    %467 = vmatpush1.bf16.msra.mxu0 0
    %468 = vmatprep.subr.bf16.mxu0 0
    %469 = vmatpush1.bf16.msra.mxu0 0
    %470 = vmatprep.subr.bf16.mxu0 0
    %471 = vmatpush1.bf16.msra.mxu0 0
    %472 = vmatprep.subr.bf16.mxu0 0
    %473 = vmatpush1.bf16.msra.mxu0 0
    %474 = vmatprep.subr.bf16.mxu0 0
    %475 = vmatpush1.bf16.msra.mxu0 0
    %476 = vmatprep.subr.bf16.mxu0 0
    %477 = vmatpush1.bf16.msra.mxu0 0
    %478 = vmatprep.subr.bf16.mxu0 0
    %479 = vmatpush1.bf16.msra.mxu0 0
    %480 = vmatprep.subr.bf16.mxu0 0
    %481 = vmatpush1.bf16.msra.mxu0 0
    %482 = vmatprep.subr.bf16.mxu0 0
    %483 = vmatpush1.bf16.msra.mxu0 0
    %484 = vmatprep.subr.bf16.mxu0 0
    %485 = vmatpush1.bf16.msra.mxu0 0
    %486 = vmatprep.subr.bf16.mxu0 0
    %487 = vmatpush1.bf16.msra.mxu0 0
    %488 = vmatprep.mubr.bf16.mxu0 0
    %489 = vmatmul.mubr.bf16.gmra.mrb[0].mxu0 %v454
    %v490 = vpop.f32.mrb[0].mxu0
    %v491 = vadd.f32 %v426, %v490
    %v492 = vpop.f32.mrb[0].mxu0
    %v493 = vpop.f32.mrb[0].mxu0
    %v494 = vpop.f32.mrb[0].mxu0
    %495 = vdwg.mxu0
    %v496 = vxor.u32 %v491, 2147483648
    %v497 = vmul.f32 %v496, 1.442695
    %v498 = vpow.pop %v497
    %v499 = vadd.f32 %v498, 1.0
    %v500 = vrcp.pop %v499
    %v501 = vmul.f32 1.0, %v500
    %vm502 = vcmask 25600
    %503 = vst.msk [vmem:[#allocation5] sm:$0x3] %vm502, %v501
    // Predicated region
    $region42: #{tpu_custom_call.1} parent=1 // pred_check
      _
    $region43: #{tpu_custom_call.1} parent=1 // pred_check_branch
      %505 = sbr.rel (0) target = $region45
    $region44: #{tpu_custom_call.1} parent=1 // pred_region
      %s507 = ssub.s32 32, 32
      %508 = vsyncadd [#allocation4], %s507
      %s510 = sshll.u32 [#allocation5], 4
      %s511 = int_to_ptr.vmem [resolvable:$true] %s510
      %513 = dma.vmem_to_hbm [thread:$0]  %s511, 32, %s9, [#allocation4]
    $region45: #{tpu_custom_call.1} parent=1 // pred_fallthru
      _
    // Predicated region
    $region46: #{tpu_custom_call.1} parent=1 // pred_check
      _
    $region47: #{tpu_custom_call.1} parent=1 // pred_check_branch
      %515 = sbr.rel (0) target = $region49
    $region48: #{tpu_custom_call.1} parent=1 // pred_region
      %516 = dma.done [#allocation4], 32
    $region49: #{tpu_custom_call.1} parent=1 // pred_fallthru
      _
    %517 = vsyncpa [#allocation3], 1
    %518 = vsyncpa [#allocation4], 1

</llo_original>
